<compile_context>
chip_gen: v7x
topology: tpu7x:2x2x1
jax: 0.10.0
libtpu: 0.0.40
codegen_flags: <defaults>
</compile_context>

<pallas_src>
import math

import jax
import jax.numpy as jnp
from jax.experimental import pallas as pl
from jax.experimental.pallas import tpu as pltpu

_LANES = 128
_SUBLANES = 8


def _prewhiten_kernel(x_ref, loc_ref, inv_ref, o_ref):
    # x_ref:   (TM, Dp) tile of lane-dense packed input
    # loc_ref: (1,  Dp) per-feature mean, tiled k times (row-broadcast)
    # inv_ref: (1,  Dp) per-feature 1/std, tiled k times
    # 2 VALU ops/elem; HBM-bandwidth bound, so no compute-side micro-opts.
    o_ref[...] = (x_ref[...] - loc_ref[...]) * inv_ref[...]


def _ceil_div(a, b):
    return -(-a // b)


def _packed_prewhiten(xp, loc_row, inv_row, *, target_block_bytes, vmem_limit_bytes):
    """xp: (Np, Dp) with Dp % 128 == 0. Returns whitened (Np, Dp)."""
    Np, Dp = xp.shape
    itemsize = jnp.dtype(xp.dtype).itemsize
    bytes_per_row = Dp * itemsize

    # Row tile sized by bytes (target ~8 MiB per buffer).  Four double-buffered
    # tile buffers (in + out) plus params must fit under the scoped-VMEM limit
    # we request, so leave ~2 MiB of margin for internal scratch.
    budget = max(vmem_limit_bytes - (2 << 20), 4 * _SUBLANES * bytes_per_row)
    max_tm_vmem = max(
        _SUBLANES, (budget // (4 * bytes_per_row)) // _SUBLANES * _SUBLANES
    )
    tm = max(
        _SUBLANES, (target_block_bytes // bytes_per_row) // _SUBLANES * _SUBLANES
    )
    tm = min(tm, max_tm_vmem)

    # Keep >= ~4 grid steps when there is enough work: on v7x each TensorCore
    # then gets >= 2 blocks, so input DMA / compute / output DMA overlap within
    # each core; on v5e/v6e it just adds prologue/epilogue overlap.
    if Np >= 4 * _SUBLANES:
        quarter = _ceil_div(_ceil_div(Np, 4), _SUBLANES) * _SUBLANES
        tm = min(tm, quarter)

    if tm >= Np:
        tm = Np  # single block covering the full array (always legal)

    grid = (_ceil_div(Np, tm),)  # non-divisible: last block is masked by Pallas

    return pl.pallas_call(
        _prewhiten_kernel,
        out_shape=jax.ShapeDtypeStruct((Np, Dp), xp.dtype),
        grid=grid,
        in_specs=[
            pl.BlockSpec((tm, Dp), lambda i: (i, 0)),
            pl.BlockSpec((1, Dp), lambda i: (0, 0)),
            pl.BlockSpec((1, Dp), lambda i: (0, 0)),
        ],
        out_specs=pl.BlockSpec((tm, Dp), lambda i: (i, 0)),
        compiler_params=pltpu.CompilerParams(
            dimension_semantics=("parallel",),
            vmem_limit_bytes=vmem_limit_bytes,
        ),
    )(xp, loc_row, inv_row)


def prewhiten(
    data,
    loc,
    inv_scale,
    *,
    target_block_bytes=8 * 1024 * 1024,
    vmem_limit_bytes=40 * 1024 * 1024,
):
    """Apply (data - loc) * inv_scale with a Pallas TPU kernel.

    data:      (N, D) float32
    loc:       (D,)   float32
    inv_scale: (D,)   float32
    """
    N, D = data.shape
    dtype = data.dtype
    loc = loc.astype(dtype)
    inv_scale = inv_scale.astype(dtype)

    if N == 0:
        return (data - loc[None, :]) * inv_scale[None, :]

    # Lane-dense packing: view (N, D) as (N/k, k*D) with k*D % 128 == 0 so
    # stores are full-width vst instead of masked partial stores (big win for
    # narrow D such as 32).  The reshape preserves row-major element order, so
    # XLA treats it as a bitcast: the aligned path adds no HBM traffic beyond
    # the kernel's own read + write.
    k = _LANES // math.gcd(D, _LANES)
    Dp = k * D
    loc_row = jnp.tile(loc, (k,)).reshape(1, Dp)
    inv_row = jnp.tile(inv_scale, (k,)).reshape(1, Dp)

    n_main = (N // k) * k
    if n_main == 0:
        # Fewer rows than one packed group (< k rows): trivial, plain JAX.
        return (data - loc[None, :]) * inv_scale[None, :]

    if n_main == N:
        xp = data.reshape(N // k, Dp)
    else:
        xp = data[:n_main].reshape(n_main // k, Dp)

    out_main = _packed_prewhiten(
        xp,
        loc_row,
        inv_row,
        target_block_bytes=target_block_bytes,
        vmem_limit_bytes=vmem_limit_bytes,
    ).reshape(n_main, D)

    if n_main == N:
        return out_main

    # Unaligned tail (< k rows, at most 127): plain JAX + concat.  Rare path
    # (only when D % 128 != 0 and N % k != 0); the common aligned path above
    # has zero extra copies (no pad, no final slice).
    tail = (data[n_main:] - loc[None, :]) * inv_scale[None, :]
    return jnp.concatenate([out_main, tail], axis=0)


def make_prewhitener_params(ref_data):
    """Deterministic parameter setup mirroring PreWhitener.__init__.

    torch.Tensor.std defaults to the unbiased estimator (N-1 denominator).
    With a single reference row this yields NaN variance; like torch, the
    `scale > 0` check then replaces it with 1.0.  (Setup glue, not the hot
    path, so it stays in plain JAX.)
    """
    n = ref_data.shape[0]
    loc = jnp.mean(ref_data, axis=0)
    var = jnp.sum((ref_data - loc[None, :]) ** 2, axis=0) / (n - 1)
    scale = jnp.sqrt(var)
    scale = jnp.where(scale > 0, scale, jnp.ones_like(scale))
    inv_scale = 1.0 / scale
    return loc, inv_scale


if __name__ == "__main__":
    key = jax.random.PRNGKey(0)
    k_ref, k_in, k_mid, k_tail = jax.random.split(key, 4)

    # --- case 1: small, D=32 exercises lane-dense packing (k=4), 1 block ----
    N_REF, D = 64, 32   # reference data used to fit loc / inv_scale
    BATCH = 8           # forward-pass batch

    ref_data = jax.random.normal(k_ref, (N_REF, D), dtype=jnp.float32) * 3.0 + 1.5
    # Make one feature constant so the scale<=0 -> 1.0 branch is exercised.
    ref_data = ref_data.at[:, 0].set(2.0)
    loc, inv_scale = make_prewhitener_params(ref_data)

    x = jax.random.normal(k_in, (BATCH, D), dtype=jnp.float32)
    out = jax.block_until_ready(prewhiten(x, loc, inv_scale))
    ref_out = (x - loc[None, :]) * inv_scale[None, :]
    assert out.shape == (BATCH, D)
    assert jnp.allclose(out, ref_out, atol=1e-6, rtol=1e-6)

    # --- case 2: multi-block path with partial boundary block (no padding) --
    N2, D2 = 300, 96    # k=4, Dp=384, Np=75 -> 4 grid steps, last block partial
    data2 = jax.random.normal(k_mid, (N2, D2), dtype=jnp.float32) * 2.0 - 0.5
    loc2, inv2 = make_prewhitener_params(data2)
    out2 = jax.block_until_ready(prewhiten(data2, loc2, inv2))
    ref2 = (data2 - loc2[None, :]) * inv2[None, :]
    assert out2.shape == (N2, D2)
    assert jnp.allclose(out2, ref2, atol=1e-6, rtol=1e-6)

    # --- case 3: unaligned row count (N % k != 0) exercises the tail path ---
    N3, D3 = 13, 32     # k=4 -> 12 rows via kernel + 1 tail row via plain JAX
    data3 = jax.random.normal(k_tail, (N3, D3), dtype=jnp.float32) + 0.25
    loc3, inv3 = make_prewhitener_params(data3)
    out3 = jax.block_until_ready(prewhiten(data3, loc3, inv3))
    ref3 = (data3 - loc3[None, :]) * inv3[None, :]
    assert out3.shape == (N3, D3)
    assert jnp.allclose(out3, ref3, atol=1e-6, rtol=1e-6)

    print("KERNEL_OK")
</pallas_src>

<mosaic_0001>
module attributes {stable_mosaic.version = 11 : i64} {
  func.func @_prewhiten_kernel(%arg0: i32, %arg1: memref<2x128xf32, #tpu.memory_space<vmem>>, %arg2: memref<1x128xf32, #tpu.memory_space<vmem>>, %arg3: memref<1x128xf32, #tpu.memory_space<vmem>>, %arg4: memref<2x128xf32, #tpu.memory_space<vmem>>) attributes {dimension_semantics = [#tpu.dimension_semantics<parallel>], iteration_bounds = array<i64: 1>, scalar_prefetch = 0 : i64, scratch_operands = 0 : i64, tpu.core_type = #tpu.core_type<tc>, window_params = [{transform_indices = @transform_0, window_bounds = array<i64: 2, 128>}, {pipeline_mode = #tpu.pipeline_mode<synchronous>, transform_indices = @transform_1, window_bounds = array<i64: 1, 128>}, {pipeline_mode = #tpu.pipeline_mode<synchronous>, transform_indices = @transform_2, window_bounds = array<i64: 1, 128>}, {transform_indices = @transform_3, window_bounds = array<i64: 2, 128>}]} {
    %c0 = arith.constant 0 : index
    %c0_0 = arith.constant 0 : index
    %0 = vector.load %arg1[%c0, %c0_0] : memref<2x128xf32, #tpu.memory_space<vmem>>, vector<2x128xf32>
    %c0_1 = arith.constant 0 : index
    %c0_2 = arith.constant 0 : index
    %1 = vector.load %arg2[%c0_1, %c0_2] : memref<1x128xf32, #tpu.memory_space<vmem>>, vector<1x128xf32>
    %2 = vector.broadcast %1 : vector<1x128xf32> to vector<2x128xf32>
    %3 = arith.subf %0, %2 : vector<2x128xf32>
    %c0_3 = arith.constant 0 : index
    %c0_4 = arith.constant 0 : index
    %4 = vector.load %arg3[%c0_3, %c0_4] : memref<1x128xf32, #tpu.memory_space<vmem>>, vector<1x128xf32>
    %5 = vector.broadcast %4 : vector<1x128xf32> to vector<2x128xf32>
    %6 = arith.mulf %3, %5 : vector<2x128xf32>
    %c0_5 = arith.constant 0 : index
    %c0_6 = arith.constant 0 : index
    %7 = vector.load %arg4[%c0_5, %c0_6] : memref<2x128xf32, #tpu.memory_space<vmem>>, vector<2x128xf32>
    tpu.vector_store %arg4[%c0_5, %c0_6], %6 {strides = array<i32>} : memref<2x128xf32, #tpu.memory_space<vmem>>, vector<2x128xf32>,
    return
  }
  func.func @transform_0(%arg0: i32) -> (i32, i32) {
    %c0_i32 = arith.constant 0 : i32
    %c0_i32_0 = arith.constant 0 : i32
    return %arg0, %c0_i32 : i32, i32
  }
  func.func @transform_1(%arg0: i32) -> (i32, i32) {
    %c0_i32 = arith.constant 0 : i32
    %c0_i32_0 = arith.constant 0 : i32
    %c0_i32_1 = arith.constant 0 : i32
    return %c0_i32, %c0_i32_0 : i32, i32
  }
  func.func @transform_2(%arg0: i32) -> (i32, i32) {
    %c0_i32 = arith.constant 0 : i32
    %c0_i32_0 = arith.constant 0 : i32
    %c0_i32_1 = arith.constant 0 : i32
    return %c0_i32, %c0_i32_0 : i32, i32
  }
  func.func @transform_3(%arg0: i32) -> (i32, i32) {
    %c0_i32 = arith.constant 0 : i32
    %c0_i32_0 = arith.constant 0 : i32
    return %arg0, %c0_i32 : i32, i32
  }
}

</mosaic_0001>

<llo_original>
// kernel: tpu_custom_call.1
$region0: #{tpu_custom_call.1}
  #allocation0 [shape = 'u32[]', space=smem, size = 0x4, offset = 0x4, fixed_abs, tag = 'smem constant byte address 0x4 - core index']
  #allocation1 [shape = 'u32[144,128]{1,0:T(1,128)}', space=vmem, size = 0x12000, scoped, tag = 'internal scratch']
  %s0 = inlined_call_operand.hbm [shape: f32[2,128], index: 0, kind: input, shape index: {}]
  %s1 = inlined_call_operand.vmem [shape: f32[1,128], index: 1, kind: input, shape index: {}]
  %s2 = inlined_call_operand.vmem [shape: f32[1,128], index: 2, kind: input, shape index: {}]
  %s3 = inlined_call_operand.hbm [shape: f32[2,128], index: 3, kind: output, shape index: {}]
  %s4 = sld [smem:[#allocation0]]
  $region26: #{tpu_custom_call.1} parent=0
    _
  %s6 = ssub.s32 1, %s4
  %s7 = scalar_select 0, %s6, %s4
  $region1: #{tpu_custom_call.1} parent=0
    #allocation2 [shape = 'u8[1024]{0}', space=vmem, size = 0x400, scoped, tag = 'input window, operand 0, single buffered']
    #allocation3 [shape = 's32[1]{0}', space=sflag, size = 0x4, scoped, tag = 'scoped memory for tpu_custom_call.1']
    #allocation4 [shape = 's32[1]{0}', space=sflag, size = 0x4, scoped, tag = 'scoped memory for tpu_custom_call.1']
    #allocation5 [shape = 'u8[1024]{0}', space=vmem, size = 0x400, scoped, tag = 'output window, operand 0, single buffered']
    %8 = vsyncpa [#allocation3], 0
    %9 = vsyncpa [#allocation4], 0
    // Predicated region
    $region2: #{tpu_custom_call.1} parent=1 // pred_check
      _
    $region3: #{tpu_custom_call.1} parent=1 // pred_check_branch
      %11 = sbr.rel (0) target = $region5
    $region4: #{tpu_custom_call.1} parent=1 // pred_region
      %s13 = ssub.s32 32, 32
      %14 = vsyncadd [#allocation3], %s13
      %s16 = sshll.u32 [#allocation2], 4
      %s17 = int_to_ptr.vmem [resolvable:$true] %s16
      %19 = dma.hbm_to_vmem [thread:$0]  %s0, 32, %s17, [#allocation3]
    $region5: #{tpu_custom_call.1} parent=1 // pred_fallthru
      _
    // Predicated region
    $region6: #{tpu_custom_call.1} parent=1 // pred_check
      _
    $region7: #{tpu_custom_call.1} parent=1 // pred_check_branch
      %21 = sbr.rel (0) target = $region9
    $region8: #{tpu_custom_call.1} parent=1 // pred_region
      _
    $region9: #{tpu_custom_call.1} parent=1 // pred_fallthru
      _
    // Predicated region
    $region10: #{tpu_custom_call.1} parent=1 // pred_check
      _
    $region11: #{tpu_custom_call.1} parent=1 // pred_check_branch
      %23 = sbr.rel (0) target = $region13
    $region12: #{tpu_custom_call.1} parent=1 // pred_region
      _
    $region13: #{tpu_custom_call.1} parent=1 // pred_fallthru
      _
    // Predicated region
    $region14: #{tpu_custom_call.1} parent=1 // pred_check
      _
    $region15: #{tpu_custom_call.1} parent=1 // pred_check_branch
      %25 = sbr.rel (0) target = $region17
    $region16: #{tpu_custom_call.1} parent=1 // pred_region
      %26 = dma.done [#allocation3], 32
    $region17: #{tpu_custom_call.1} parent=1 // pred_fallthru
      _
    %v27 = vld [vmem:[#allocation2] sm:$0x3]
    %v28 = vld [vmem:[%s1] sm:$0x1]
    %v30 = vlaneseq
    %v31 = vshrl.u32 %v30, 7
    %v32 = vsub.s32 0, %v31
    %v33 = vrot.slane %v28, %v32
    %v35 = vsub.f32 %v27, %v33
    %v36 = vld [vmem:[%s2] sm:$0x1]
    %v38 = vlaneseq
    %v39 = vshrl.u32 %v38, 7
    %v40 = vsub.s32 0, %v39
    %v41 = vrot.slane %v36, %v40
    %v43 = vmul.f32 %v35, %v41
    %44 = vst [vmem:[#allocation5] sm:$0x3] %v43
    // Predicated region
    $region18: #{tpu_custom_call.1} parent=1 // pred_check
      _
    $region19: #{tpu_custom_call.1} parent=1 // pred_check_branch
      %46 = sbr.rel (0) target = $region21
    $region20: #{tpu_custom_call.1} parent=1 // pred_region
      %s48 = ssub.s32 32, 32
      %49 = vsyncadd [#allocation4], %s48
      %s51 = sshll.u32 [#allocation5], 4
      %s52 = int_to_ptr.vmem [resolvable:$true] %s51
      %54 = dma.vmem_to_hbm [thread:$0]  %s52, 32, %s3, [#allocation4]
    $region21: #{tpu_custom_call.1} parent=1 // pred_fallthru
      _
    // Predicated region
    $region22: #{tpu_custom_call.1} parent=1 // pred_check
      _
    $region23: #{tpu_custom_call.1} parent=1 // pred_check_branch
      %56 = sbr.rel (0) target = $region25
    $region24: #{tpu_custom_call.1} parent=1 // pred_region
      %57 = dma.done [#allocation4], 32
    $region25: #{tpu_custom_call.1} parent=1 // pred_fallthru
      _
    %58 = vsyncpa [#allocation3], 1
    %59 = vsyncpa [#allocation4], 1

</llo_original>
